<compile_context>
chip_gen: v5e
topology: v5e:2x2
jax: 0.10.0
libtpu: 0.0.40
codegen_flags: <defaults>
</compile_context>

<pallas_src>
import functools

import jax
import jax.numpy as jnp
from jax.experimental import pallas as pl
from jax.experimental.pallas import tpu as pltpu


# ----------------------------------------------------------------------------
# Kernel: per token-block, compute padded logits, top-k, sparse softmax.
# ----------------------------------------------------------------------------
def gating_kernel(x_ref, w_ref, b_ref, sparse_ref, idx_ref, logits_ref, *,
                  topk, e_pad):
    # Lane-dense padded logits; bf16 inputs, f32 MXU accumulation.  Padded lanes
    # carry a finfo.min bias, so they never enter the top-k (given topk <= E).
    logits = (
        jnp.dot(x_ref[...], w_ref[...], preferred_element_type=jnp.float32)
        + b_ref[...]
    )                                                       # (tn, e_pad) f32
    logits_ref[...] = logits

    lane = jax.lax.broadcasted_iota(jnp.int32, logits.shape, 1)   # expert ids
    neg_inf = jnp.float32(-jnp.inf)
    work = logits
    idx_full = jnp.zeros(logits.shape, dtype=jnp.int32)

    # topk is tiny (e.g. 2); static Python unroll.  Iteratively peel off the
    # current max (ties -> lowest index, matching lax.top_k / torch.topk).
    for j in range(topk):
        m = jnp.max(work, axis=-1, keepdims=True)                 # (tn, 1)
        cand = jnp.where(work == m, lane, e_pad)
        idx_j = jnp.min(cand, axis=-1, keepdims=True)             # (tn, 1) i32
        work = jnp.where(lane == idx_j, neg_inf, work)            # peel winner
        # Lane-dense index output: column j of the padded index block.
        idx_full = jnp.where(lane == j, idx_j, idx_full)

    idx_ref[...] = idx_full.astype(idx_ref.dtype)                 # int8 store

    # Selected lanes are exactly the ones peeled to -inf (padded lanes hold
    # finfo.min, which is finite, so the test is unambiguous for finite inputs).
    sparse = jnp.where(work == neg_inf, logits, neg_inf)
    m = jnp.max(sparse, axis=-1, keepdims=True)
    p = jnp.exp(sparse - m)
    inv = pl.reciprocal(jnp.sum(p, axis=-1, keepdims=True), approx=True)
    sparse_ref[...] = p * inv


# ----------------------------------------------------------------------------
# Wrapper
# ----------------------------------------------------------------------------
def gating_forward(x, w, b, topk, *, tn=None, compute_dtype=jnp.bfloat16):
    """x: (B, S, H), w: (H, E), b: (E,).

    Returns (sparse_logits (B,S,E), indices (B,S,topk) int32, gate_logit (B*S,E)),
    matching the PyTorch Gating.forward semantics (bf16-input routing logits).
    """
    bsz, seq, h = x.shape
    n = bsz * seq
    e = w.shape[1]
    assert topk <= e, "topk must not exceed the number of experts"
    assert e <= 127, "int8 index storage requires expert_num <= 127"
    e_pad = pl.cdiv(e, 128) * 128          # lane-dense padded expert dim
    xbytes = jnp.dtype(compute_dtype).itemsize

    x_flat = x.reshape(n, h).astype(compute_dtype)

    # Pad expert dim: zero weights + finfo.min bias for the padded experts.
    w_pad = jnp.zeros((h, e_pad), compute_dtype).at[:, :e].set(w.astype(compute_dtype))
    b_pad = jnp.full((1, e_pad), jnp.finfo(jnp.float32).min, jnp.float32)
    b_pad = b_pad.at[0, :e].set(b.astype(jnp.float32))

    # Token-block tiling, sized from H and an explicit VMEM budget.
    if tn is None:
        budget = 24 << 20                              # leave headroom under the limit
        fixed = 2 * h * e_pad * xbytes + 2 * e_pad * 4          # w + b (dbl-buffered)
        per_row = 2 * h * xbytes + 2 * e_pad * (4 + 1 + 4)      # x + 3 outputs (dbl-buf)
        tn_cap = max(32, (budget - fixed) // per_row)
        tn_cap = min(1024, (tn_cap // 32) * 32)
        if n <= 64:
            tn = n                                     # full-dim block (always legal)
        else:
            # >= 2 blocks so v7x's two TensorCores both get work on the parallel axis.
            half = ((pl.cdiv(n, 2) + 31) // 32) * 32
            tn = max(32, min(tn_cap, half))
    grid = (pl.cdiv(n, tn),)

    kernel = functools.partial(gating_kernel, topk=topk, e_pad=e_pad)
    sparse_p, idx_p, logits_p = pl.pallas_call(
        kernel,
        out_shape=(
            jax.ShapeDtypeStruct((n, e_pad), jnp.float32),   # sparse softmax
            jax.ShapeDtypeStruct((n, e_pad), jnp.int8),      # padded indices (narrow)
            jax.ShapeDtypeStruct((n, e_pad), jnp.float32),   # raw logits
        ),
        grid_spec=pltpu.PrefetchScalarGridSpec(
            num_scalar_prefetch=0,
            grid=grid,
            in_specs=[
                pl.BlockSpec((tn, h), lambda i: (i, 0)),       # x token block (bf16)
                pl.BlockSpec((h, e_pad), lambda i: (0, 0)),    # gating weight (fetched once)
                pl.BlockSpec((1, e_pad), lambda i: (0, 0)),    # gating bias (fetched once)
            ],
            out_specs=(
                pl.BlockSpec((tn, e_pad), lambda i: (i, 0)),
                pl.BlockSpec((tn, e_pad), lambda i: (i, 0)),
                pl.BlockSpec((tn, e_pad), lambda i: (i, 0)),
            ),
        ),
        compiler_params=pltpu.CompilerParams(
            dimension_semantics=("parallel",),
            vmem_limit_bytes=32 << 20,
        ),
    )(x_flat, w_pad, b_pad)

    # These slices run inside the caller's jit; for large n hand the padded
    # arrays downstream instead to avoid extra HBM passes.
    sparse_logits = sparse_p[:, :e].reshape(bsz, seq, e)
    indices = idx_p[:, :topk].astype(jnp.int32).reshape(bsz, seq, topk)
    gate_logit = logits_p[:, :e]                    # == logits.view(-1, E)
    return sparse_logits, indices, gate_logit


# ----------------------------------------------------------------------------
# Pure-JAX reference (mirrors the PyTorch module, same bf16 compute dtype)
# ----------------------------------------------------------------------------
def gating_reference(x, w, b, topk, compute_dtype=jnp.bfloat16):
    bsz, seq, h = x.shape
    e = w.shape[1]
    logits = (
        jnp.dot(x.reshape(-1, h).astype(compute_dtype), w.astype(compute_dtype),
                preferred_element_type=jnp.float32)
        + b.astype(jnp.float32)
    ).reshape(bsz, seq, e)
    _, top_idx = jax.lax.top_k(logits, topk)                     # (B, S, K)
    sel_mask = jnp.any(
        jax.lax.broadcasted_iota(jnp.int32, (bsz, seq, topk, e), 3)
        == top_idx[..., None],
        axis=2,
    )                                                            # (B, S, E)
    sparse_logits = jax.nn.softmax(jnp.where(sel_mask, logits, -jnp.inf), axis=-1)
    gate_logit = logits.reshape(-1, e)
    return sparse_logits, top_idx, gate_logit


# ----------------------------------------------------------------------------
if __name__ == "__main__":
    hidden_size = 32
    expert_num = 4
    topk = 2
    batch, seq = 2, 8

    key = jax.random.PRNGKey(0)
    k1, k2, k3 = jax.random.split(key, 3)
    scale = 0.02
    w = scale * jax.random.normal(k1, (hidden_size, expert_num), jnp.float32)
    b = scale * jax.random.normal(k2, (expert_num,), jnp.float32)
    x = jax.random.normal(k3, (batch, seq, hidden_size), jnp.float32)

    fwd = jax.jit(functools.partial(gating_forward, topk=topk))
    sparse_logits, indices, gate_logit = fwd(x, w, b)
    jax.block_until_ready((sparse_logits, indices, gate_logit))

    ref_sparse, ref_idx, ref_logit = gating_reference(x, w, b, topk)
    assert sparse_logits.shape == (batch, seq, expert_num)
    assert indices.shape == (batch, seq, topk)
    assert gate_logit.shape == (batch * seq, expert_num)
    assert jnp.allclose(gate_logit, ref_logit, atol=1e-4, rtol=1e-4), "gate_logit mismatch"
    assert jnp.array_equal(indices, ref_idx), "indices mismatch"
    # approx reciprocal (EUP) gives ~2^-12 relative error on the softmax rows.
    assert jnp.allclose(sparse_logits, ref_sparse, atol=2e-3, rtol=2e-3), "sparse_logits mismatch"

    print("KERNEL_OK")
</pallas_src>

<mosaic_0001>
module attributes {stable_mosaic.version = 11 : i64} {
  func.func @gating_kernel(%arg0: i32, %arg1: memref<16x32xbf16, #tpu.memory_space<vmem>>, %arg2: memref<32x128xbf16, #tpu.memory_space<vmem>>, %arg3: memref<1x128xf32, #tpu.memory_space<vmem>>, %arg4: memref<16x128xf32, #tpu.memory_space<vmem>>, %arg5: memref<16x128xi8, #tpu.memory_space<vmem>>, %arg6: memref<16x128xf32, #tpu.memory_space<vmem>>) attributes {dimension_semantics = [#tpu.dimension_semantics<parallel>], iteration_bounds = array<i64: 1>, scalar_prefetch = 0 : i64, scratch_operands = 0 : i64, tpu.core_type = #tpu.core_type<tc>, window_params = [{transform_indices = @transform_0, window_bounds = array<i64: 16, 32>}, {pipeline_mode = #tpu.pipeline_mode<synchronous>, transform_indices = @transform_1, window_bounds = array<i64: 32, 128>}, {pipeline_mode = #tpu.pipeline_mode<synchronous>, transform_indices = @transform_2, window_bounds = array<i64: 1, 128>}, {transform_indices = @transform_3, window_bounds = array<i64: 16, 128>}, {transform_indices = @transform_4, window_bounds = array<i64: 16, 128>}, {transform_indices = @transform_5, window_bounds = array<i64: 16, 128>}]} {
    %c0 = arith.constant 0 : index
    %c0_0 = arith.constant 0 : index
    %0 = vector.load %arg1[%c0, %c0_0] : memref<16x32xbf16, #tpu.memory_space<vmem>>, vector<16x32xbf16>
    %c0_1 = arith.constant 0 : index
    %c0_2 = arith.constant 0 : index
    %1 = vector.load %arg2[%c0_1, %c0_2] : memref<32x128xbf16, #tpu.memory_space<vmem>>, vector<32x128xbf16>
    %cst = arith.constant dense<0.000000e+00> : vector<16x128xf32>
    %2 = tpu.matmul %0, %1, %cst {dimension_numbers = #tpu.dot_dimension_numbers<[1], [0], [0], [1], [0, 0, 1, 1], [], []>} : vector<16x32xbf16>, vector<32x128xbf16>, vector<16x128xf32> -> vector<16x128xf32>
    %c0_3 = arith.constant 0 : index
    %c0_4 = arith.constant 0 : index
    %3 = vector.load %arg3[%c0_3, %c0_4] : memref<1x128xf32, #tpu.memory_space<vmem>>, vector<1x128xf32>
    %4 = vector.broadcast %3 : vector<1x128xf32> to vector<16x128xf32>
    %5 = arith.addf %2, %4 : vector<16x128xf32>
    %c0_5 = arith.constant 0 : index
    %c0_6 = arith.constant 0 : index
    %6 = vector.load %arg6[%c0_5, %c0_6] : memref<16x128xf32, #tpu.memory_space<vmem>>, vector<16x128xf32>
    tpu.vector_store %arg6[%c0_5, %c0_6], %5 {strides = array<i32>} : memref<16x128xf32, #tpu.memory_space<vmem>>, vector<16x128xf32>,
    %7 = tpu.iota {dimensions = array<i32: 1>} : vector<16x128xi32>
    %c0_i32 = arith.constant 0 : i32
    %8 = vector.broadcast %c0_i32 : i32 to vector<16x128xi32>
    %cst_7 = arith.constant dense<0xFF800000> : vector<16xf32>
    %9 = vector.multi_reduction <maximumf>, %5, %cst_7 [1] : vector<16x128xf32> to vector<16xf32>
    %10 = vector.shape_cast %9 : vector<16xf32> to vector<16x1xf32>
    %11 = vector.broadcast %10 : vector<16x1xf32> to vector<16x128xf32>
    %12 = arith.cmpf oeq, %5, %11 : vector<16x128xf32>
    %c128_i32 = arith.constant 128 : i32
    %13 = vector.broadcast %c128_i32 : i32 to vector<16x128xi32>
    %14 = arith.select %12, %7, %13 : vector<16x128xi1>, vector<16x128xi32>
    %cst_8 = arith.constant dense<2147483647> : vector<16xi32>
    %15 = vector.multi_reduction <minsi>, %14, %cst_8 [1] : vector<16x128xi32> to vector<16xi32>
    %16 = vector.shape_cast %15 : vector<16xi32> to vector<16x1xi32>
    %17 = vector.broadcast %16 : vector<16x1xi32> to vector<16x128xi32>
    %18 = arith.cmpi eq, %7, %17 : vector<16x128xi32>
    %cst_9 = arith.constant 0xFF800000 : f32
    %19 = vector.broadcast %cst_9 : f32 to vector<16x128xf32>
    %20 = arith.select %18, %19, %5 : vector<16x128xi1>, vector<16x128xf32>
    %c0_i32_10 = arith.constant 0 : i32
    %21 = vector.broadcast %c0_i32_10 : i32 to vector<16x128xi32>
    %22 = arith.cmpi eq, %7, %21 : vector<16x128xi32>
    %23 = vector.shape_cast %16 : vector<16x1xi32> to vector<16x1xi32>
    %24 = vector.broadcast %23 : vector<16x1xi32> to vector<16x128xi32>
    %25 = arith.select %22, %24, %8 : vector<16x128xi1>, vector<16x128xi32>
    %cst_11 = arith.constant dense<0xFF800000> : vector<16xf32>
    %26 = vector.multi_reduction <maximumf>, %20, %cst_11 [1] : vector<16x128xf32> to vector<16xf32>
    %27 = vector.shape_cast %26 : vector<16xf32> to vector<16x1xf32>
    %28 = vector.broadcast %27 : vector<16x1xf32> to vector<16x128xf32>
    %29 = arith.cmpf oeq, %20, %28 : vector<16x128xf32>
    %c128_i32_12 = arith.constant 128 : i32
    %30 = vector.broadcast %c128_i32_12 : i32 to vector<16x128xi32>
    %31 = arith.select %29, %7, %30 : vector<16x128xi1>, vector<16x128xi32>
    %cst_13 = arith.constant dense<2147483647> : vector<16xi32>
    %32 = vector.multi_reduction <minsi>, %31, %cst_13 [1] : vector<16x128xi32> to vector<16xi32>
    %33 = vector.shape_cast %32 : vector<16xi32> to vector<16x1xi32>
    %34 = vector.broadcast %33 : vector<16x1xi32> to vector<16x128xi32>
    %35 = arith.cmpi eq, %7, %34 : vector<16x128xi32>
    %cst_14 = arith.constant 0xFF800000 : f32
    %36 = vector.broadcast %cst_14 : f32 to vector<16x128xf32>
    %37 = arith.select %35, %36, %20 : vector<16x128xi1>, vector<16x128xf32>
    %c1_i32 = arith.constant 1 : i32
    %38 = vector.broadcast %c1_i32 : i32 to vector<16x128xi32>
    %39 = arith.cmpi eq, %7, %38 : vector<16x128xi32>
    %40 = vector.shape_cast %33 : vector<16x1xi32> to vector<16x1xi32>
    %41 = vector.broadcast %40 : vector<16x1xi32> to vector<16x128xi32>
    %42 = arith.select %39, %41, %25 : vector<16x128xi1>, vector<16x128xi32>
    %43 = arith.trunci %42 : vector<16x128xi32> to vector<16x128xi8>
    %c0_15 = arith.constant 0 : index
    %c0_16 = arith.constant 0 : index
    %44 = vector.load %arg5[%c0_15, %c0_16] : memref<16x128xi8, #tpu.memory_space<vmem>>, vector<16x128xi8>
    tpu.vector_store %arg5[%c0_15, %c0_16], %43 {strides = array<i32>} : memref<16x128xi8, #tpu.memory_space<vmem>>, vector<16x128xi8>,
    %cst_17 = arith.constant 0xFF800000 : f32
    %45 = vector.broadcast %cst_17 : f32 to vector<16x128xf32>
    %46 = arith.cmpf oeq, %37, %45 : vector<16x128xf32>
    %cst_18 = arith.constant 0xFF800000 : f32
    %47 = vector.broadcast %cst_18 : f32 to vector<16x128xf32>
    %48 = arith.select %46, %5, %47 : vector<16x128xi1>, vector<16x128xf32>
    %cst_19 = arith.constant dense<0xFF800000> : vector<16xf32>
    %49 = vector.multi_reduction <maximumf>, %48, %cst_19 [1] : vector<16x128xf32> to vector<16xf32>
    %50 = vector.shape_cast %49 : vector<16xf32> to vector<16x1xf32>
    %51 = vector.broadcast %50 : vector<16x1xf32> to vector<16x128xf32>
    %52 = arith.subf %48, %51 : vector<16x128xf32>
    %53 = math.exp %52 : vector<16x128xf32>
    %cst_20 = arith.constant dense<0.000000e+00> : vector<16xf32>
    %54 = vector.multi_reduction <add>, %53, %cst_20 [1] : vector<16x128xf32> to vector<16xf32>
    %55 = vector.shape_cast %54 : vector<16xf32> to vector<16x1xf32>
    %56 = tpu.reciprocal %55 {approx = true} : vector<16x1xf32> -> vector<16x1xf32>
    %57 = vector.broadcast %56 : vector<16x1xf32> to vector<16x128xf32>
    %58 = arith.mulf %53, %57 : vector<16x128xf32>
    %c0_21 = arith.constant 0 : index
    %c0_22 = arith.constant 0 : index
    %59 = vector.load %arg4[%c0_21, %c0_22] : memref<16x128xf32, #tpu.memory_space<vmem>>, vector<16x128xf32>
    tpu.vector_store %arg4[%c0_21, %c0_22], %58 {strides = array<i32>} : memref<16x128xf32, #tpu.memory_space<vmem>>, vector<16x128xf32>,
    return
  }
  func.func @transform_0(%arg0: i32) -> (i32, i32) {
    %c0_i32 = arith.constant 0 : i32
    %c0_i32_0 = arith.constant 0 : i32
    return %arg0, %c0_i32 : i32, i32
  }
  func.func @transform_1(%arg0: i32) -> (i32, i32) {
    %c0_i32 = arith.constant 0 : i32
    %c0_i32_0 = arith.constant 0 : i32
    %c0_i32_1 = arith.constant 0 : i32
    return %c0_i32, %c0_i32_0 : i32, i32
  }
  func.func @transform_2(%arg0: i32) -> (i32, i32) {
    %c0_i32 = arith.constant 0 : i32
    %c0_i32_0 = arith.constant 0 : i32
    %c0_i32_1 = arith.constant 0 : i32
    return %c0_i32, %c0_i32_0 : i32, i32
  }
  func.func @transform_3(%arg0: i32) -> (i32, i32) {
    %c0_i32 = arith.constant 0 : i32
    %c0_i32_0 = arith.constant 0 : i32
    return %arg0, %c0_i32 : i32, i32
  }
  func.func @transform_4(%arg0: i32) -> (i32, i32) {
    %c0_i32 = arith.constant 0 : i32
    %c0_i32_0 = arith.constant 0 : i32
    return %arg0, %c0_i32 : i32, i32
  }
  func.func @transform_5(%arg0: i32) -> (i32, i32) {
    %c0_i32 = arith.constant 0 : i32
    %c0_i32_0 = arith.constant 0 : i32
    return %arg0, %c0_i32 : i32, i32
  }
}

</mosaic_0001>

<llo_original>
// kernel: gating_forward.1
$region0: #{gating_forward.1}
  #allocation0 [shape = 'u32[]', space=smem, size = 0x4, offset = 0x4, fixed_abs, tag = 'smem constant byte address 0x4 - core index']
  #allocation1 [shape = 'u32[72,128]{1,0:T(1,128)}', space=vmem, size = 0x9000, scoped, tag = 'internal scratch']
  %s0 = inlined_call_operand.vmem [shape: bf16[16,32], index: 0, kind: input, shape index: {}]
  %s1 = inlined_call_operand.vmem [shape: bf16[32,128], index: 1, kind: input, shape index: {}]
  %s2 = inlined_call_operand.vmem [shape: f32[1,128], index: 2, kind: input, shape index: {}]
  %s3 = inlined_call_operand.vmem [shape: f32[16,128], index: 3, kind: output, shape index: {0}]
  %s4 = inlined_call_operand.vmem [shape: s8[16,128], index: 4, kind: output, shape index: {1}]
  %s5 = inlined_call_operand.vmem [shape: f32[16,128], index: 5, kind: output, shape index: {2}]
  %6 = xla_tuple %s3, %s4, %s5
  %s7 = sld [smem:[#allocation0]]
  $region38: #{gating_forward.1} parent=0
    _
  %s9 = ssub.s32 1, %s7
  %s10 = scalar_select 0, %s9, %s7
  // Predicated region
  $region2: #{gating_forward.1} parent=0 // pred_check
    _
  $region3: #{gating_forward.1} parent=0 // pred_check_branch
    %12 = sbr.rel (0) target = $region5
  $region4: #{gating_forward.1} parent=0 // pred_region
    _
  $region5: #{gating_forward.1} parent=0 // pred_fallthru
    _
  // Predicated region
  $region6: #{gating_forward.1} parent=0 // pred_check
    _
  $region7: #{gating_forward.1} parent=0 // pred_check_branch
    %14 = sbr.rel (0) target = $region9
  $region8: #{gating_forward.1} parent=0 // pred_region
    _
  $region9: #{gating_forward.1} parent=0 // pred_fallthru
    _
  // Predicated region
  $region10: #{gating_forward.1} parent=0 // pred_check
    _
  $region11: #{gating_forward.1} parent=0 // pred_check_branch
    %16 = sbr.rel (0) target = $region13
  $region12: #{gating_forward.1} parent=0 // pred_region
    _
  $region13: #{gating_forward.1} parent=0 // pred_fallthru
    _
  %v18 = vld [vmem:[%s0] sm:$0xf]
  %v19 = vld [vmem:[%s0 + $0x4] sm:$0xf]
  %v20 = vld [vmem:[%s1] sm:$0xf]
  %v21 = vld [vmem:[%s1 + $0x4] sm:$0xf]
  %v22 = vld [vmem:[%s1 + $0x8] sm:$0xf]
  %v23 = vld [vmem:[%s1 + $0xc] sm:$0xf]
  %v24 = vld [vmem:[%s2] sm:$0x1]
  %v26 = vperm.slane %v24, 0
  %v30 = vunpack.c.l.b16 %v18
  %v31 = vunpack.c.l.b16 %v19
  %v32 = vpack.c.b16 %v31, %v30
  %v37 = vunpack.c.l.b16 %v20
  %v38 = vunpack.c.l.b16 %v21
  %v39 = vunpack.c.l.b16 %v22
  %v40 = vunpack.c.l.b16 %v23
  %v41 = vpack.c.b16 %v38, %v37
  %v42 = vpack.c.b16 %v40, %v39
  %vm45 = vcmask 261120
  %v47 = vsel %vm45, %v32, 0
  %49 = vmatpush.bf16.msra.mxu0 0
  %50 = vmatpush.bf16.msra.mxu0 0
  %51 = vmatpush.bf16.msra.mxu0 0
  %52 = vmatpush.bf16.msra.mxu0 0
  %53 = vmatpush.bf16.msra.mxu0 0
  %54 = vmatpush.bf16.msra.mxu0 0
  %55 = vmatpush.bf16.msra.mxu0 %v42
  %56 = vmatpush.bf16.msra.mxu0 %v41
  %57 = vmatmul.bf16.gmra.mxu0 %v47
  %v58 = vpop.f32.mrf.mxu0
  %v59 = vadd.f32 %v26, %v58
  %v60 = vpop.f32.mrf.mxu0
  %v61 = vadd.f32 %v26, %v60
  %62 = vdwg.mxu0
  %63 = vst [vmem:[%s5] sm:$0xff] %v59
  %64 = vst [vmem:[%s5 + $0x8] sm:$0xff] %v61
  %v65 = vlaneseq
  %v66 = vand.u32 %v65, 127
  %67 = vmax.xlane.f32.xlu0 %v59
  %v68 = vpop.xlane.xlu0 %67
  %69 = vmax.xlane.f32.xlu0 %v61
  %v70 = vpop.xlane.xlu0 %69
  %vm71 = vcmp.eq.f32.partialorder %v59, %v68
  %vm72 = vcmp.eq.f32.partialorder %v61, %v70
  %v73 = vsel %vm71, %v66, 128
  %v74 = vsel %vm72, %v66, 128
  %v75 = vand.u32 %v73, 65535
  %v76 = vshra.s32 %v73, 16
  %v77 = vcvt.s32.f32 %v75
  %v78 = vcvt.s32.f32 %v76
  %79 = vmin.xlane.f32.xlu0 %v78
  %v80 = vpop.xlane.xlu0 %79
  %vm81 = vcmp.eq.f32.partialorder %v78, %v80
  %v82 = vsel %vm81, %v77, inf
  %83 = vmin.xlane.f32.xlu0 %v82
  %v84 = vpop.xlane.xlu0 %83
  %v85 = vcvt.f32.s32 %v84
  %v86 = vcvt.f32.s32 %v80
  %v87 = vshll.u32 %v86, 16
  %v88 = vadd.s32 %v87, %v85
  %v89 = vand.u32 %v74, 65535
  %v90 = vshra.s32 %v74, 16
  %v91 = vcvt.s32.f32 %v89
  %v92 = vcvt.s32.f32 %v90
  %93 = vmin.xlane.f32.xlu0 %v92
  %v94 = vpop.xlane.xlu0 %93
  %vm95 = vcmp.eq.f32.partialorder %v92, %v94
  %v96 = vsel %vm95, %v91, inf
  %97 = vmin.xlane.f32.xlu0 %v96
  %v98 = vpop.xlane.xlu0 %97
  %v99 = vcvt.f32.s32 %v98
  %v100 = vcvt.f32.s32 %v94
  %v101 = vshll.u32 %v100, 16
  %v102 = vadd.s32 %v101, %v99
  %vm103 = vcmp.eq.s32.totalorder %v66, %v88
  %vm104 = vcmp.eq.s32.totalorder %v66, %v102
  %v105 = vsel %vm103, -inf, %v59
  %v106 = vsel %vm104, -inf, %v61
  %vm107 = vcmp.eq.s32.totalorder %v66, 0
  %v108 = vsel %vm107, %v88, 0
  %v109 = vsel %vm107, %v102, 0
  %110 = vmax.xlane.f32.xlu0 %v105
  %v111 = vpop.xlane.xlu0 %110
  %112 = vmax.xlane.f32.xlu0 %v106
  %v113 = vpop.xlane.xlu0 %112
  %vm114 = vcmp.eq.f32.partialorder %v105, %v111
  %vm115 = vcmp.eq.f32.partialorder %v106, %v113
  %v116 = vsel %vm114, %v66, 128
  %v117 = vsel %vm115, %v66, 128
  %v118 = vand.u32 %v116, 65535
  %v119 = vshra.s32 %v116, 16
  %v120 = vcvt.s32.f32 %v118
  %v121 = vcvt.s32.f32 %v119
  %122 = vmin.xlane.f32.xlu0 %v121
  %v123 = vpop.xlane.xlu0 %122
  %vm124 = vcmp.eq.f32.partialorder %v121, %v123
  %v125 = vsel %vm124, %v120, inf
  %126 = vmin.xlane.f32.xlu0 %v125
  %v127 = vpop.xlane.xlu0 %126
  %v128 = vcvt.f32.s32 %v127
  %v129 = vcvt.f32.s32 %v123
  %v130 = vshll.u32 %v129, 16
  %v131 = vadd.s32 %v130, %v128
  %v132 = vand.u32 %v117, 65535
  %v133 = vshra.s32 %v117, 16
  %v134 = vcvt.s32.f32 %v132
  %v135 = vcvt.s32.f32 %v133
  %136 = vmin.xlane.f32.xlu0 %v135
  %v137 = vpop.xlane.xlu0 %136
  %vm138 = vcmp.eq.f32.partialorder %v135, %v137
  %v139 = vsel %vm138, %v134, inf
  %140 = vmin.xlane.f32.xlu0 %v139
  %v141 = vpop.xlane.xlu0 %140
  %v142 = vcvt.f32.s32 %v141
  %v143 = vcvt.f32.s32 %v137
  %v144 = vshll.u32 %v143, 16
  %v145 = vadd.s32 %v144, %v142
  %vm146 = vcmp.eq.s32.totalorder %v66, %v131
  %vm147 = vcmp.eq.s32.totalorder %v66, %v145
  %v148 = vsel %vm146, -inf, %v105
  %v149 = vsel %vm147, -inf, %v106
  %vm150 = vcmp.eq.s32.totalorder %v66, 1
  %v151 = vsel %vm150, %v131, %v108
  %v152 = vsel %vm150, %v145, %v109
  %v153 = vpack.c.b16 %v151, %v151
  %v154 = vpack.c.b8 %v153, %v153
  %v155 = vpack.c.b16 %v152, %v152
  %v156 = vpack.c.b8 %v155, %v155
  %157 = vst [vmem:[%s4] sm:$0x3] %v154
  %158 = vst [vmem:[%s4 + $0x2] sm:$0x3] %v156
  %vm159 = vcmp.eq.f32.partialorder %v148, -inf
  %vm160 = vcmp.eq.f32.partialorder %v149, -inf
  %v161 = vsel %vm159, %v59, -inf
  %v162 = vsel %vm160, %v61, -inf
  %163 = vmax.xlane.f32.xlu0 %v161
  %v164 = vpop.xlane.xlu0 %163
  %165 = vmax.xlane.f32.xlu0 %v162
  %v166 = vpop.xlane.xlu0 %165
  %v167 = vsub.f32 %v161, %v164
  %v168 = vsub.f32 %v162, %v166
  %v169 = vmul.f32 %v167, 1.442695
  %v170 = vpow.pop %v169
  %v171 = vmul.f32 %v168, 1.442695
  %v172 = vpow.pop %v171
  %173 = vadd.xlane.f32.xlu0 %v170
  %v174 = vpop.xlane.xlu0 %173
  %175 = vadd.xlane.f32.xlu0 %v172
  %v176 = vpop.xlane.xlu0 %175
  %v177 = vrcp.pop %v174
  %v178 = vrcp.pop %v176
  %v179 = vmul.f32 %v170, %v177
  %v180 = vmul.f32 %v172, %v178
  %181 = vst [vmem:[%s3] sm:$0xff] %v179
  %182 = vst [vmem:[%s3 + $0x8] sm:$0xff] %v180
  // Predicated region
  $region14: #{gating_forward.1} parent=0 // pred_check
    _
  $region15: #{gating_forward.1} parent=0 // pred_check_branch
    %184 = sbr.rel (0) target = $region17
  $region16: #{gating_forward.1} parent=0 // pred_region
    _
  $region17: #{gating_forward.1} parent=0 // pred_fallthru
    _
  // Predicated region
  $region18: #{gating_forward.1} parent=0 // pred_check
    _
  $region19: #{gating_forward.1} parent=0 // pred_check_branch
    %186 = sbr.rel (0) target = $region21
  $region20: #{gating_forward.1} parent=0 // pred_region
    _
  $region21: #{gating_forward.1} parent=0 // pred_fallthru
    _
  // Predicated region
  $region22: #{gating_forward.1} parent=0 // pred_check
    _
  $region23: #{gating_forward.1} parent=0 // pred_check_branch
    %188 = sbr.rel (0) target = $region25
  $region24: #{gating_forward.1} parent=0 // pred_region
    _
  $region25: #{gating_forward.1} parent=0 // pred_fallthru
    _
  // Predicated region
  $region26: #{gating_forward.1} parent=0 // pred_check
    _
  $region27: #{gating_forward.1} parent=0 // pred_check_branch
    %190 = sbr.rel (0) target = $region29
  $region28: #{gating_forward.1} parent=0 // pred_region
    _
  $region29: #{gating_forward.1} parent=0 // pred_fallthru
    _
  // Predicated region
  $region30: #{gating_forward.1} parent=0 // pred_check
    _
  $region31: #{gating_forward.1} parent=0 // pred_check_branch
    %192 = sbr.rel (0) target = $region33
  $region32: #{gating_forward.1} parent=0 // pred_region
    _
  $region33: #{gating_forward.1} parent=0 // pred_fallthru
    _
  // Predicated region
  $region34: #{gating_forward.1} parent=0 // pred_check
    _
  $region35: #{gating_forward.1} parent=0 // pred_check_branch
    %194 = sbr.rel (0) target = $region37
  $region36: #{gating_forward.1} parent=0 // pred_region
    _
  $region37: #{gating_forward.1} parent=0 // pred_fallthru
    _

</llo_original>
